<compile_context>
chip_gen: v7x
topology: tpu7x:2x2x1
jax: 0.10.0
libtpu: 0.0.40
codegen_flags: <defaults>
</compile_context>

<pallas_src>
import numpy as np
import jax
import jax.numpy as jnp
from jax.experimental import pallas as pl
from jax.experimental.pallas import tpu as pltpu


# ---------------------------------------------------------------------------
# Deterministic orthonormal initializer (numpy port of the reference code,
# seeded so the script is reproducible).  Runs once at parameter setup.
# ---------------------------------------------------------------------------
def orthonormal_initializer(output_size, input_size, seed=0):
    rng = np.random.RandomState(seed)
    I = np.eye(output_size)
    lr = 0.1
    eps = 0.05 / (output_size + input_size)
    success = False
    tries = 0
    Q = None
    while not success and tries < 10:
        Q = rng.randn(input_size, output_size) / np.sqrt(output_size)
        for _ in range(100):
            QTQmI = Q.T.dot(Q) - I
            loss = np.sum(QTQmI ** 2 / 2)
            Q2 = Q ** 2
            Q -= lr * Q.dot(QTQmI) / (
                np.abs(Q2 + Q2.sum(axis=0, keepdims=True)
                       + Q2.sum(axis=1, keepdims=True) - 1) + eps)
            if np.max(Q) > 1e6 or loss > 1e6 or (not np.isfinite(loss)):
                tries += 1
                lr /= 2
                break
        else:
            success = True
            break
        success = True  # mirror reference control flow
    if not success:
        Q = rng.randn(input_size, output_size) / np.sqrt(output_size)
    return np.transpose(Q.astype(np.float32))  # [output_size, input_size]


# ---------------------------------------------------------------------------
# Helpers
# ---------------------------------------------------------------------------
def _round_up(x, m):
    return (x + m - 1) // m * m


def _choose_tile(dim, candidates):
    """Pick the tile minimizing round_up(dim, tile); tie-break on larger tile."""
    best_t, best_pad = None, None
    for t in candidates:
        pad = _round_up(dim, t)
        if best_pad is None or pad < best_pad or (pad == best_pad and t > best_t):
            best_pad, best_t = pad, t
    return best_t


def _vmem_cap_bytes():
    """Per-generation scoped-VMEM cap with headroom for Mosaic internals."""
    try:
        info = pltpu.get_tpu_info()
        cap = int(getattr(info, "vmem_capacity_bytes", 0)) or (64 << 20)
    except Exception:
        cap = 64 << 20  # conservative (v7x physical VMEM per TC)
    return max(cap - (16 << 20), 32 << 20)


# Below this (M * H * D) size, XLA's plain dot beats padded tiles + launch cost.
_SMALL_PROBLEM = 128 * 128 * 128


# ---------------------------------------------------------------------------
# Kernels
# ---------------------------------------------------------------------------
def _make_single_k_kernel(activation):
    # K fits in a single tile: no accumulator scratch needed at all.
    def kernel(x_ref, wt_ref, b_ref, o_ref):
        # x_ref: (TM, TK)  wt_ref: (TK, TN)  b_ref: (1, TN)  o_ref: (TM, TN)
        y = jnp.dot(x_ref[...], wt_ref[...], preferred_element_type=jnp.float32)
        y = y + b_ref[...]
        if activation is not None:
            y = activation(y)
        o_ref[...] = y.astype(o_ref.dtype)

    return kernel


def _make_multi_k_kernel(activation):
    def kernel(x_ref, wt_ref, b_ref, o_ref, acc_ref):
        # x_ref: (TM, TK)  wt_ref: (TK, TN)  b_ref: (1, TN)
        # o_ref: (TM, TN)  acc_ref: (TM, TN) f32 scratch
        k = pl.program_id(2)
        nk = pl.num_programs(2)
        partial = jnp.dot(x_ref[...], wt_ref[...],
                          preferred_element_type=jnp.float32)

        @pl.when(k == 0)
        def _():
            acc_ref[...] = partial

        @pl.when(jnp.logical_and(k > 0, k < nk - 1))
        def _():
            acc_ref[...] += partial

        @pl.when(k == nk - 1)
        def _():
            # Fold the last partial product in directly: saves one full
            # TMxTN f32 acc store+load on the final K step.
            y = acc_ref[...] + partial + b_ref[...]
            if activation is not None:
                y = activation(y)
            o_ref[...] = y.astype(o_ref.dtype)

    return kernel


# ---------------------------------------------------------------------------
# NonLinear module (Pallas TPU)
# ---------------------------------------------------------------------------
class NonLinearTPU:
    """Pallas TPU implementation of the PyTorch NonLinear module."""

    _TN_CANDIDATES = (512, 256, 128)
    _TK_CANDIDATES = (1024, 512, 256, 128)

    def __init__(self, W, b, activation=None, compute_dtype=jnp.float32):
        if activation is not None and not callable(activation):
            raise ValueError(
                "activation must be callable: type={}".format(type(activation)))
        W = jnp.asarray(W, dtype=jnp.float32)
        b = jnp.asarray(b, dtype=jnp.float32)
        self.hidden_size, self.input_size = W.shape
        self.activation = activation
        self.compute_dtype = jnp.dtype(compute_dtype)
        self._sublane = 16 if self.compute_dtype == jnp.dtype(jnp.bfloat16) else 8

        H, D = self.hidden_size, self.input_size
        self.TN = _choose_tile(H, self._TN_CANDIDATES)
        self.TK = _choose_tile(D, self._TK_CANDIDATES)
        self.H_pad = _round_up(H, self.TN)
        self.D_pad = _round_up(D, self.TK)

        # --- one-time parameter prep: pad + pre-transpose W so the kernel
        #     streams canonical (TK, TN) RHS tiles; no per-call W HBM pass.
        Wt = jnp.transpose(W)  # [D, H]
        if (self.D_pad, self.H_pad) != (D, H):
            Wt = jnp.pad(Wt, ((0, self.D_pad - D), (0, self.H_pad - H)))
        self.Wt_pad = Wt.astype(self.compute_dtype)
        b_pad = b if self.H_pad == H else jnp.pad(b, (0, self.H_pad - H))
        self.b_pad = b_pad.reshape(1, self.H_pad)

        # Unpadded parameters for the tiny-shape fallback path.
        self.W = W
        self.b = b

        # Kernels built once (reused across calls -> stable dispatch cache).
        self._kernel_single = _make_single_k_kernel(activation)
        self._kernel_multi = _make_multi_k_kernel(activation)

    # -- tile selection for the batch dimension ------------------------------
    def _choose_tm(self, M):
        a = self._sublane
        if M <= 512:
            TM = max(_round_up(M, a), a)          # minimal M padding
        else:
            TM = _choose_tile(M, (512, 256, 128))  # big tiles, minimal padding
        M_pad = _round_up(M, TM)
        # v7x megacore: guarantee >= 2 "parallel" output tiles so both
        # TensorCores get work when the (i, j) grid would otherwise be 1x1.
        if (M_pad // TM) * (self.H_pad // self.TN) == 1 and M >= 2 * a:
            TM = _round_up((M + 1) // 2, a)
            M_pad = _round_up(M, TM)
        return TM, M_pad

    # -- forward --------------------------------------------------------------
    def __call__(self, x, force_pallas=False):
        x = jnp.asarray(x)
        if x.shape[-1] != self.input_size:
            raise ValueError("expected last dim {}, got {}".format(
                self.input_size, x.shape[-1]))
        lead = x.shape[:-1]
        M = int(np.prod(lead)) if lead else 1
        H, D = self.hidden_size, self.input_size
        xm = x.reshape(M, D)

        # Tiny problems: lane padding + pallas_call launch overhead dwarfs the
        # actual compute -> let XLA handle it.
        if not force_pallas and M * H * D < _SMALL_PROBLEM:
            y = jnp.dot(xm.astype(jnp.float32), self.W.T) + self.b
            if self.activation is not None:
                y = self.activation(y)
            return y.reshape(*lead, H)

        TM, M_pad = self._choose_tm(M)
        TN, TK = self.TN, self.TK

        xm = xm.astype(self.compute_dtype)
        if (M_pad, self.D_pad) != (M, D):
            xm = jnp.pad(xm, ((0, M_pad - M), (0, self.D_pad - D)))

        grid = (M_pad // TM, self.H_pad // TN, self.D_pad // TK)
        nk = grid[2]

        # Scoped-VMEM budget: double-buffered x/W^T/bias/out + f32 accumulator,
        # capped below the per-generation physical VMEM size.
        op_bytes = self.compute_dtype.itemsize
        tile_bytes = (2 * (TM * TK + TK * TN) * op_bytes
                      + 2 * TN * 4 + 2 * TM * TN * 4 + TM * TN * 4)
        vmem_limit = int(min(max(2 * tile_bytes, 16 << 20), _vmem_cap_bytes()))

        kernel = self._kernel_multi if nk > 1 else self._kernel_single
        scratch = [pltpu.VMEM((TM, TN), jnp.float32)] if nk > 1 else []

        out = pl.pallas_call(
            kernel,
            out_shape=jax.ShapeDtypeStruct((M_pad, self.H_pad), jnp.float32),
            grid_spec=pltpu.PrefetchScalarGridSpec(
                num_scalar_prefetch=0,
                grid=grid,
                in_specs=[
                    pl.BlockSpec((TM, TK), lambda i, j, k: (i, k)),   # x tile
                    pl.BlockSpec((TK, TN), lambda i, j, k: (k, j)),   # W^T tile
                    pl.BlockSpec((1, TN), lambda i, j, k: (0, j)),    # bias
                ],
                out_specs=pl.BlockSpec((TM, TN), lambda i, j, k: (i, j)),
                scratch_shapes=scratch,
            ),
            compiler_params=pltpu.CompilerParams(
                dimension_semantics=("parallel", "parallel", "arbitrary"),
                vmem_limit_bytes=vmem_limit,
            ),
        )(xm, self.Wt_pad, self.b_pad)

        out = out[:M, :H]
        return out.reshape(*lead, H)


# ---------------------------------------------------------------------------
# Demo / correctness check
# ---------------------------------------------------------------------------
if __name__ == "__main__":
    key = jax.random.PRNGKey(0)

    # ---- 1) module-implied small shape: [batch, seq, input] ----------------
    batch, seq, input_size, hidden_size = 2, 8, 32, 32
    x = jax.random.normal(key, (batch, seq, input_size), dtype=jnp.float32)
    W = jnp.asarray(orthonormal_initializer(hidden_size, input_size, seed=0))
    b = jnp.zeros((hidden_size,), dtype=jnp.float32)
    ref = jnp.einsum("bsd,hd->bsh", x, W) + b

    mod_id = NonLinearTPU(W, b, activation=None)
    y_small_auto = mod_id(x)                        # auto-dispatch (tiny -> XLA)
    y_small_pallas = mod_id(x, force_pallas=True)   # exercise the Pallas kernel
    jax.block_until_ready((y_small_auto, y_small_pallas))
    assert y_small_pallas.shape == (batch, seq, hidden_size)
    assert jnp.allclose(y_small_auto, ref, atol=1e-5, rtol=1e-5)
    assert jnp.allclose(y_small_pallas, ref, atol=1e-5, rtol=1e-5)

    mod_relu = NonLinearTPU(W, b, activation=jax.nn.relu)
    y_relu = mod_relu(x, force_pallas=True)
    jax.block_until_ready(y_relu)
    assert jnp.allclose(y_relu, jax.nn.relu(ref), atol=1e-5, rtol=1e-5)

    # ---- 2) non-lane-aligned shape: padding + split-i grid -----------------
    in2, hid2 = 40, 200
    x2 = jax.random.normal(jax.random.PRNGKey(1), (3, 7, in2), dtype=jnp.float32)
    W2 = jnp.asarray(orthonormal_initializer(hid2, in2, seed=1))
    b2 = jax.random.normal(jax.random.PRNGKey(2), (hid2,), dtype=jnp.float32)
    mod_tanh = NonLinearTPU(W2, b2, activation=jnp.tanh)
    y2 = mod_tanh(x2, force_pallas=True)
    jax.block_until_ready(y2)
    ref2 = jnp.tanh(jnp.einsum("bsd,hd->bsh", x2, W2) + b2)
    assert y2.shape == (3, 7, hid2)
    assert jnp.allclose(y2, ref2, atol=1e-5, rtol=1e-5)

    # ---- 3) larger shape: multi-K accumulator + multi-j grid ---------------
    in3, hid3 = 384, 640
    x3 = jax.random.normal(jax.random.PRNGKey(3), (4, 96, in3), dtype=jnp.float32)
    W3 = jax.random.normal(jax.random.PRNGKey(4), (hid3, in3),
                           dtype=jnp.float32) / np.sqrt(in3)
    b3 = jax.random.normal(jax.random.PRNGKey(5), (hid3,), dtype=jnp.float32)
    mod3 = NonLinearTPU(W3, b3, activation=jax.nn.relu)
    y3 = mod3(x3)                                   # auto-dispatch -> Pallas
    jax.block_until_ready(y3)
    ref3 = jax.nn.relu(jnp.einsum("bsd,hd->bsh", x3, W3) + b3)
    assert y3.shape == (4, 96, hid3)
    assert jnp.allclose(y3, ref3, atol=1e-3, rtol=1e-4)

    # ---- 4) optional bf16-operand path (f32 accumulation) ------------------
    mod3_bf16 = NonLinearTPU(W3, b3, activation=jax.nn.relu,
                             compute_dtype=jnp.bfloat16)
    y3_bf16 = mod3_bf16(x3)
    jax.block_until_ready(y3_bf16)
    assert y3_bf16.shape == (4, 96, hid3)
    assert bool(jnp.all(jnp.isfinite(y3_bf16)))
    assert jnp.allclose(y3_bf16, ref3, atol=1e-1, rtol=1e-1)

    print("KERNEL_OK")
</pallas_src>

<mosaic_0001>
module attributes {stable_mosaic.version = 11 : i64} {
  func.func @kernel(%arg0: i32, %arg1: i32, %arg2: i32, %arg3: memref<8x128xf32, #tpu.memory_space<vmem>>, %arg4: memref<128x128xf32, #tpu.memory_space<vmem>>, %arg5: memref<1x128xf32, #tpu.memory_space<vmem>>, %arg6: memref<8x128xf32, #tpu.memory_space<vmem>>) attributes {dimension_semantics = [#tpu.dimension_semantics<parallel>, #tpu.dimension_semantics<parallel>, #tpu.dimension_semantics<arbitrary>], iteration_bounds = array<i64: 2, 1, 1>, scalar_prefetch = 0 : i64, scratch_operands = 0 : i64, tpu.core_type = #tpu.core_type<tc>, window_params = [{transform_indices = @transform_0, window_bounds = array<i64: 8, 128>}, {transform_indices = @transform_1, window_bounds = array<i64: 128, 128>}, {transform_indices = @transform_2, window_bounds = array<i64: 1, 128>}, {transform_indices = @transform_3, window_bounds = array<i64: 8, 128>}]} {
    %c0 = arith.constant 0 : index
    %c0_0 = arith.constant 0 : index
    %0 = vector.load %arg3[%c0, %c0_0] : memref<8x128xf32, #tpu.memory_space<vmem>>, vector<8x128xf32>
    %c0_1 = arith.constant 0 : index
    %c0_2 = arith.constant 0 : index
    %1 = vector.load %arg4[%c0_1, %c0_2] : memref<128x128xf32, #tpu.memory_space<vmem>>, vector<128x128xf32>
    %cst = arith.constant dense<0.000000e+00> : vector<8x128xf32>
    %2 = tpu.matmul %0, %1, %cst {dimension_numbers = #tpu.dot_dimension_numbers<[1], [0], [0], [1], [0, 0, 1, 1], [], []>} : vector<8x128xf32>, vector<128x128xf32>, vector<8x128xf32> -> vector<8x128xf32>
    %c0_3 = arith.constant 0 : index
    %c0_4 = arith.constant 0 : index
    %3 = vector.load %arg5[%c0_3, %c0_4] : memref<1x128xf32, #tpu.memory_space<vmem>>, vector<1x128xf32>
    %4 = vector.broadcast %3 : vector<1x128xf32> to vector<8x128xf32>
    %5 = arith.addf %2, %4 : vector<8x128xf32>
    %c0_5 = arith.constant 0 : index
    %c0_6 = arith.constant 0 : index
    %6 = vector.load %arg6[%c0_5, %c0_6] : memref<8x128xf32, #tpu.memory_space<vmem>>, vector<8x128xf32>
    tpu.vector_store %arg6[%c0_5, %c0_6], %5 {strides = array<i32>} : memref<8x128xf32, #tpu.memory_space<vmem>>, vector<8x128xf32>,
    return
  }
  func.func @transform_0(%arg0: i32, %arg1: i32, %arg2: i32) -> (i32, i32) {
    %c0_i32 = arith.constant 0 : i32
    return %arg0, %arg2 : i32, i32
  }
  func.func @transform_1(%arg0: i32, %arg1: i32, %arg2: i32) -> (i32, i32) {
    %c0_i32 = arith.constant 0 : i32
    return %arg2, %arg1 : i32, i32
  }
  func.func @transform_2(%arg0: i32, %arg1: i32, %arg2: i32) -> (i32, i32) {
    %c0_i32 = arith.constant 0 : i32
    %c0_i32_0 = arith.constant 0 : i32
    return %c0_i32, %arg1 : i32, i32
  }
  func.func @transform_3(%arg0: i32, %arg1: i32, %arg2: i32) -> (i32, i32) {
    %c0_i32 = arith.constant 0 : i32
    return %arg0, %arg1 : i32, i32
  }
}

</mosaic_0001>

<llo_original>
// kernel: tpu_custom_call.1
$region0: #{tpu_custom_call.1}
  #allocation0 [shape = 'u32[]', space=smem, size = 0x4, offset = 0x4, fixed_abs, tag = 'smem constant byte address 0x4 - core index']
  #allocation1 [shape = 'u32[144,128]{1,0:T(1,128)}', space=vmem, size = 0x12000, scoped, tag = 'internal scratch']
  %s0 = inlined_call_operand.hbm [shape: f32[16,128], index: 0, kind: input, shape index: {}]
  %s1 = inlined_call_operand.hbm [shape: f32[128,128], index: 1, kind: input, shape index: {}]
  %s2 = inlined_call_operand.vmem [shape: f32[1,128], index: 2, kind: input, shape index: {}]
  %s3 = inlined_call_operand.hbm [shape: f32[16,128], index: 3, kind: output, shape index: {}]
  %s4 = sld [smem:[#allocation0]]
  $region53: #{tpu_custom_call.1} parent=0
    _
  %s6 = ssub.s32 1, %s4
  %s7 = scalar_select 0, %s6, %s4
  $region1: #{tpu_custom_call.1} parent=0
    #allocation2 [shape = 'u8[8192]{0}', space=vmem, size = 0x2000, scoped, tag = 'input window, operand 0']
    #allocation3 [shape = 's32[2]{0}', space=sflag, size = 0x8, scoped, tag = 'scoped memory for tpu_custom_call.1']
    #allocation4 [shape = 's32[2]{0}', space=sflag, size = 0x8, scoped, tag = 'scoped memory for tpu_custom_call.1']
    #allocation5 [shape = 'u8[65536]{0}', space=vmem, size = 0x10000, scoped, tag = 'input window, operand 1, single buffered']
    #allocation6 [shape = 's32[1]{0}', space=sflag, size = 0x4, scoped, tag = 'scoped memory for tpu_custom_call.1']
    #allocation7 [shape = 'u8[8192]{0}', space=vmem, size = 0x2000, scoped, tag = 'output window, operand 0']
    %8 = vsyncpa [#allocation3], 0
    %s9 = scalar_lea.sflag [#allocation3], 1
    %10 = vsyncpa %s9, 0
    %11 = vsyncpa [#allocation6], 0
    %12 = vsyncpa [#allocation4], 0
    %s13 = scalar_lea.sflag [#allocation4], 1
    %14 = vsyncpa %s13, 0
    loop: start=0, step=1, limit=4
    $region2: #{tpu_custom_call.1} parent=1 // loop_pre_header
      _
    $region3: #{tpu_custom_call.1} parent=1 // loop_header
      %s16 = sphi 0, %s20
      %p17 = scmp.ge.s32.totalorder %s16, 4
      %s23 = sphi 0, %s42
      %s24 = sphi 0, %s38
      %s25 = sphi 0, %s34
      %s26 = sphi 0, %s23
      %s27 = sphi 0, %s24
      %s28 = sphi 0, %s25
      %s29 = sphi 0, %s26
      %s30 = sphi 0, %s27
      %s31 = sphi 0, %s28
      %s47 = sphi 0, %s49
      %s50 = sphi 0, %s47
      %s51 = sphi 0, %s50
      %s67 = sphi 0, %s51
      %s75 = sphi 0, %s77
      %s78 = sphi 0, %s75
      %s79 = sphi 0, %s78
      %s95 = sphi 0, %s79
      %s101 = sphi 0, %s103
      %s104 = sphi 0, %s101
      %s105 = sphi 0, %s104
      %s121 = sphi 0, %s105
      %s129 = sphi 0, %s131
      %s132 = sphi 0, %s129
      %s133 = sphi 0, %s132
      %s149 = sphi 0, %s133
    $region4: #{tpu_custom_call.1} parent=1 // loop_header_branch
      %19 = sbr.rel (%p17) target = $region8
    $region5: #{tpu_custom_call.1} parent=1 // loop_body
      %s21 = ssub.s32 %s16, 1
      %s22 = ssub.s32 %s16, 2
      %s32 = sadd.s32 1, %s25
      %p33 = scmp.ge.s32.totalorder %s32, 1
      %s34 = scalar_select %p33, 0, %s32
      %s35 = sadd.s32 1, %s24
      %s36 = scalar_select %p33, %s35, %s24
      %p37 = scmp.ge.s32.totalorder %s36, 1
      %s38 = scalar_select %p37, 0, %s36
      %s39 = sadd.s32 1, %s23
      %s40 = scalar_select %p37, %s39, %s23
      %p41 = scmp.ge.s32.totalorder %s40, 2
      %s42 = scalar_select %p41, 0, %s40
      %s43 = ssub.s32 %s23, %s42
      %s44 = ssub.s32 %s25, %s34
      %s45 = sor.u32 %s43, %s44
      %p46 = scmp.eq.s32.totalorder %s45, 0
      %s48 = sadd.s32 %s47, 1
      %s49 = scalar_select %p46, %s47, %s48
      %p52 = pneg %p46
      %p53 = scmp.eq.s32.totalorder %s16, 1
      %p54 = por %p52, %p53
      %p55 = scmp.ne.s32.totalorder %s47, %s50
      %p56 = scmp.eq.s32.totalorder %s16, 0
      %p57 = por %p55, %p56
      %p58 = scmp.ne.s32.totalorder %s47, %s50
      %p59 = scmp.eq.s32.totalorder %s21, 1
      %p60 = por %p58, %p59
      %p61 = scmp.ne.s32.totalorder %s50, %s51
      %p62 = scmp.eq.s32.totalorder %s21, 0
      %p63 = por %p61, %p62
      %p64 = scmp.ne.s32.totalorder %s50, %s51
      %p65 = scmp.eq.s32.totalorder %s22, 1
      %p66 = por %p64, %p65
      %p68 = scmp.ne.s32.totalorder %s51, %s67
      %p69 = scmp.eq.s32.totalorder %s22, 0
      %p70 = por %p68, %p69
      %s71 = ssub.s32 %s25, %s34
      %s72 = ssub.s32 %s24, %s38
      %s73 = sor.u32 %s71, %s72
      %p74 = scmp.eq.s32.totalorder %s73, 0
      %s76 = sadd.s32 %s75, 1
      %s77 = scalar_select %p74, %s75, %s76
      %p80 = pneg %p74
      %p81 = scmp.eq.s32.totalorder %s16, 1
      %p82 = por %p80, %p81
      %p83 = scmp.ne.s32.totalorder %s75, %s78
      %p84 = scmp.eq.s32.totalorder %s16, 0
      %p85 = por %p83, %p84
      %p86 = scmp.ne.s32.totalorder %s75, %s78
      %p87 = scmp.eq.s32.totalorder %s21, 1
      %p88 = por %p86, %p87
      %p89 = scmp.ne.s32.totalorder %s78, %s79
      %p90 = scmp.eq.s32.totalorder %s21, 0
      %p91 = por %p89, %p90
      %p92 = scmp.ne.s32.totalorder %s78, %s79
      %p93 = scmp.eq.s32.totalorder %s22, 1
      %p94 = por %p92, %p93
      %p96 = scmp.ne.s32.totalorder %s79, %s95
      %p97 = scmp.eq.s32.totalorder %s22, 0
      %p98 = por %p96, %p97
      %s99 = ssub.s32 %s24, %s38
      %p100 = scmp.eq.s32.totalorder %s99, 0
      %s102 = sadd.s32 %s101, 1
      %s103 = scalar_select %p100, %s101, %s102
      %p106 = pneg %p100
      %p107 = scmp.eq.s32.totalorder %s16, 1
      %p108 = por %p106, %p107
      %p109 = scmp.ne.s32.totalorder %s101, %s104
      %p110 = scmp.eq.s32.totalorder %s16, 0
      %p111 = por %p109, %p110
      %p112 = scmp.ne.s32.totalorder %s101, %s104
      %p113 = scmp.eq.s32.totalorder %s21, 1
      %p114 = por %p112, %p113
      %p115 = scmp.ne.s32.totalorder %s104, %s105
      %p116 = scmp.eq.s32.totalorder %s21, 0
      %p117 = por %p115, %p116
      %p118 = scmp.ne.s32.totalorder %s104, %s105
      %p119 = scmp.eq.s32.totalorder %s22, 1
      %p120 = por %p118, %p119
      %p122 = scmp.ne.s32.totalorder %s105, %s121
      %p123 = scmp.eq.s32.totalorder %s22, 0
      %p124 = por %p122, %p123
      %s125 = ssub.s32 %s23, %s42
      %s126 = ssub.s32 %s24, %s38
      %s127 = sor.u32 %s125, %s126
      %p128 = scmp.eq.s32.totalorder %s127, 0
      %s130 = sadd.s32 %s129, 1
      %s131 = scalar_select %p128, %s129, %s130
      %p134 = pneg %p128
      %p135 = scmp.eq.s32.totalorder %s16, 1
      %p136 = por %p134, %p135
      %p137 = scmp.ne.s32.totalorder %s129, %s132
      %p138 = scmp.eq.s32.totalorder %s16, 0
      %p139 = por %p137, %p138
      %p140 = scmp.ne.s32.totalorder %s129, %s132
      %p141 = scmp.eq.s32.totalorder %s21, 1
      %p142 = por %p140, %p141
      %p143 = scmp.ne.s32.totalorder %s132, %s133
      %p144 = scmp.eq.s32.totalorder %s21, 0
      %p145 = por %p143, %p144
      %p146 = scmp.ne.s32.totalorder %s132, %s133
      %p147 = scmp.eq.s32.totalorder %s22, 1
      %p148 = por %p146, %p147
      %p150 = scmp.ne.s32.totalorder %s133, %s149
      %p151 = scmp.eq.s32.totalorder %s22, 0
      %p152 = por %p150, %p151
      %p153 = scmp.le.s32.totalorder 1, %s16
      %p154 = scmp.lt.s32.totalorder %s16, 3
      %p155 = pnand %p153, %p154
      %p156 = pneg %p155
      // Predicated region
      $region9: #{tpu_custom_call.1} parent=5 // pred_check
        _
      $region10: #{tpu_custom_call.1} parent=5 // pred_check_branch
        %158 = sbr.rel (%p155) target = $region12
      $region11: #{tpu_custom_call.1} parent=5 // pred_region
        %s159 = ssub.s32 %s16, 1
        // Predicated region
        $region13: #{tpu_custom_call.1} parent=11 // pred_check
          %p160 = pneg %p91
        $region14: #{tpu_custom_call.1} parent=11 // pred_check_branch
          %162 = sbr.rel (%p160) target = $region16
        $region15: #{tpu_custom_call.1} parent=11 // pred_region
          %s163 = smul.u32 16, %s28
          %s165 = ssub.s32 2048, 2048
          %166 = vsyncadd [#allocation6], %s165
          %s167 = sadd.s32 %s27, %s163
          %s168 = smul.addr %s167, 128
          %s169 = scalar_lea.hbm %s1, %s168
          %s170 = sshll.u32 [#allocation5], 4
          %s171 = int_to_ptr.vmem [resolvable:$true] %s170
          %176 = dma.hbm_to_vmem [thread:$0]  %s169, 2048, %s171, [#allocation6], 128, 128, 8
        $region16: #{tpu_custom_call.1} parent=11 // pred_fallthru
          _
        // Predicated region
        $region17: #{tpu_custom_call.1} parent=11 // pred_check
          %p177 = pneg %p117
        $region18: #{tpu_custom_call.1} parent=11 // pred_check_branch
          %179 = sbr.rel (%p177) target = $region20
        $region19: #{tpu_custom_call.1} parent=11 // pred_region
          %p180 = scmp.lt.s32.totalorder %s27, 0
          %s181 = scalar_select %p180, %s27, 0
          %s182 = scalar_lea.vmem %s2, %s181
        $region20: #{tpu_custom_call.1} parent=11 // pred_fallthru
          _
      $region12: #{tpu_custom_call.1} parent=5 // pred_fallthru
        _
      %p183 = scmp.lt.s32.totalorder %s16, 2
      // Predicated region
      $region21: #{tpu_custom_call.1} parent=5 // pred_check
        %p184 = pneg %p183
      $region22: #{tpu_custom_call.1} parent=5 // pred_check_branch
        %186 = sbr.rel (%p184) target = $region24
      $region23: #{tpu_custom_call.1} parent=5 // pred_region
        // Predicated region
        $region25: #{tpu_custom_call.1} parent=23 // pred_check
          %p187 = pneg %p57
        $region26: #{tpu_custom_call.1} parent=23 // pred_check_branch
          %189 = sbr.rel (%p187) target = $region28
        $region27: #{tpu_custom_call.1} parent=23 // pred_region
          %s190 = sand.u32 %s47, 1
          %s191 = scalar_lea.sflag [#allocation3], %s190
          %s192 = sand.u32 %s47, 1
          %s193 = smul.addr %s192, 8
          %s194 = scalar_lea.vmem [#allocation2], %s193
          %s196 = ssub.s32 128, 128
          %197 = vsyncadd %s191, %s196
          %s198 = sadd.s32 %s25, %s23
          %s199 = smul.addr %s198, 128
          %s200 = scalar_lea.hbm %s0, %s199
          %s202 = sshll.u32 %s194, 4
          %s203 = int_to_ptr.vmem [resolvable:$true] %s202
          %205 = dma.hbm_to_vmem [thread:$0]  %s200, 128, %s203, %s191
        $region28: #{tpu_custom_call.1} parent=23 // pred_fallthru
          _
      $region24: #{tpu_custom_call.1} parent=5 // pred_fallthru
        _
      %p206 = scmp.le.s32.totalorder 1, %s16
      %p207 = scmp.lt.s32.totalorder %s16, 3
      %p208 = pnand %p206, %p207
      %p209 = pneg %p208
      // Predicated region
      $region29: #{tpu_custom_call.1} parent=5 // pred_check
        _
      $region30: #{tpu_custom_call.1} parent=5 // pred_check_branch
        %211 = sbr.rel (%p208) target = $region32
      $region31: #{tpu_custom_call.1} parent=5 // pred_region
        %s212 = ssub.s32 %s16, 1
        %s213 = sand.u32 %s50, 1
        %s214 = scalar_lea.sflag [#allocation3], %s213
        %s215 = sand.u32 %s50, 1
        %s216 = smul.addr %s215, 8
        %s217 = scalar_lea.vmem [#allocation2], %s216
        // Predicated region
        $region33: #{tpu_custom_call.1} parent=31 // pred_check
          %p218 = pneg %p63
        $region34: #{tpu_custom_call.1} parent=31 // pred_check_branch
          %220 = sbr.rel (%p218) target = $region36
        $region35: #{tpu_custom_call.1} parent=31 // pred_region
          %221 = dma.done %s214, 128
        $region36: #{tpu_custom_call.1} parent=31 // pred_fallthru
          _
        // Predicated region
        $region37: #{tpu_custom_call.1} parent=31 // pred_check
          %p222 = pneg %p91
        $region38: #{tpu_custom_call.1} parent=31 // pred_check_branch
          %224 = sbr.rel (%p222) target = $region40
        $region39: #{tpu_custom_call.1} parent=31 // pred_region
          %225 = dma.done [#allocation6], 2048
        $region40: #{tpu_custom_call.1} parent=31 // pred_fallthru
          _
        %s226 = sand.u32 %s50, 1
        %s227 = scalar_lea.sflag [#allocation3], %s226
        %s228 = sand.u32 %s50, 1
        %s229 = smul.addr %s228, 8
        %s230 = scalar_lea.vmem [#allocation2], %s229
        %p231 = pneg %p63
        %p232 = pneg %p60
        %p233 = pneg %p91
        %p234 = pneg %p88
        %p235 = scmp.lt.s32.totalorder %s27, 0
        %s236 = scalar_select %p235, %s27, 0
        %s237 = scalar_lea.vmem %s2, %s236
        %p238 = pneg %p117
        %p239 = pneg %p114
        %p240 = pneg %p145
        %p241 = pneg %p142
        %s242 = sand.u32 %s132, 1
        %s243 = scalar_lea.sflag [#allocation4], %s242
        %s244 = sand.u32 %s132, 1
        %s245 = smul.addr %s244, 8
        %s246 = scalar_lea.vmem [#allocation7], %s245
        %s247 = smul.u32 16, %s28
        %p248 = scmp.lt.s32.totalorder %s27, 0
        %s249 = scalar_select %p248, %s27, 0
        %s250 = scalar_lea.vmem %s2, %s249
        %v251 = vld [vmem:[%s217] sm:$0xff]
        %v252 = vld [vmem:[#allocation5] sm:$0xff]
        %v253 = vld [vmem:[#allocation5 + $0x8] sm:$0xff]
        %v254 = vld [vmem:[#allocation5 + $0x10] sm:$0xff]
        %v255 = vld [vmem:[#allocation5 + $0x18] sm:$0xff]
        %v256 = vld [vmem:[#allocation5 + $0x20] sm:$0xff]
        %v257 = vld [vmem:[#allocation5 + $0x28] sm:$0xff]
        %v258 = vld [vmem:[#allocation5 + $0x30] sm:$0xff]
        %v259 = vld [vmem:[#allocation5 + $0x38] sm:$0xff]
        %v260 = vld [vmem:[#allocation5 + $0x40] sm:$0xff]
        %v261 = vld [vmem:[#allocation5 + $0x48] sm:$0xff]
        %v262 = vld [vmem:[#allocation5 + $0x50] sm:$0xff]
        %v263 = vld [vmem:[#allocation5 + $0x58] sm:$0xff]
        %v264 = vld [vmem:[#allocation5 + $0x60] sm:$0xff]
        %v265 = vld [vmem:[#allocation5 + $0x68] sm:$0xff]
        %v266 = vld [vmem:[#allocation5 + $0x70] sm:$0xff]
        %v267 = vld [vmem:[#allocation5 + $0x78] sm:$0xff]
        %v268 = vld [vmem:[%s250] sm:$0x1]
        %v270 = vlaneseq
        %v271 = vshrl.u32 %v270, 7
        %v272 = vsub.s32 0, %v271
        %v273 = vrot.slane %v268, %v272
        %275 = vmatprep.subr.mxu0 0.0
        %276 = vmatpush1.msra.mxu0 %v252
        %277 = vmatprep.subr.mxu0 0.0
        %278 = vmatpush1.msra.mxu0 %v253
        %279 = vmatprep.subr.mxu0 0.0
        %280 = vmatpush1.msra.mxu0 %v254
        %281 = vmatprep.subr.mxu0 0.0
        %282 = vmatpush1.msra.mxu0 %v255
        %283 = vmatprep.subr.mxu0 0.0
        %284 = vmatpush1.msra.mxu0 %v256
        %285 = vmatprep.subr.mxu0 0.0
        %286 = vmatpush1.msra.mxu0 %v257
        %287 = vmatprep.subr.mxu0 0.0
        %288 = vmatpush1.msra.mxu0 %v258
        %289 = vmatprep.subr.mxu0 0.0
        %290 = vmatpush1.msra.mxu0 %v259
        %291 = vmatprep.subr.mxu0 0.0
        %292 = vmatpush1.msra.mxu0 %v260
        %293 = vmatprep.subr.mxu0 0.0
        %294 = vmatpush1.msra.mxu0 %v261
        %295 = vmatprep.subr.mxu0 0.0
        %296 = vmatpush1.msra.mxu0 %v262
        %297 = vmatprep.subr.mxu0 0.0
        %298 = vmatpush1.msra.mxu0 %v263
        %299 = vmatprep.subr.mxu0 0.0
        %300 = vmatpush1.msra.mxu0 %v264
        %301 = vmatprep.subr.mxu0 0.0
        %302 = vmatpush1.msra.mxu0 %v265
        %303 = vmatprep.subr.mxu0 0.0
        %304 = vmatpush1.msra.mxu0 %v266
        %305 = vmatprep.subr.mxu0 0.0
        %306 = vmatpush1.msra.mxu0 %v267
        %307 = vmatprep.subr.mxu0 0.0
        %308 = vmatpush1.msra.mxu0 0.0
        %309 = vmatprep.subr.mxu0 0.0
        %310 = vmatpush1.msra.mxu0 0.0
        %311 = vmatprep.subr.mxu0 0.0
        %312 = vmatpush1.msra.mxu0 0.0
        %313 = vmatprep.subr.mxu0 0.0
        %314 = vmatpush1.msra.mxu0 0.0
        %315 = vmatprep.subr.mxu0 0.0
        %316 = vmatpush1.msra.mxu0 0.0
        %317 = vmatprep.subr.mxu0 0.0
        %318 = vmatpush1.msra.mxu0 0.0
        %319 = vmatprep.subr.mxu0 0.0
        %320 = vmatpush1.msra.mxu0 0.0
        %321 = vmatprep.subr.mxu0 0.0
        %322 = vmatpush1.msra.mxu0 0.0
        %323 = vmatprep.subr.mxu0 0.0
        %324 = vmatpush1.msra.mxu0 0.0
        %325 = vmatprep.subr.mxu0 0.0
        %326 = vmatpush1.msra.mxu0 0.0
        %327 = vmatprep.subr.mxu0 0.0
        %328 = vmatpush1.msra.mxu0 0.0
        %329 = vmatprep.subr.mxu0 0.0
        %330 = vmatpush1.msra.mxu0 0.0
        %331 = vmatprep.subr.mxu0 0.0
        %332 = vmatpush1.msra.mxu0 0.0
        %333 = vmatprep.subr.mxu0 0.0
        %334 = vmatpush1.msra.mxu0 0.0
        %335 = vmatprep.subr.mxu0 0.0
        %336 = vmatpush1.msra.mxu0 0.0
        %337 = vmatprep.subr.mxu0 0.0
        %338 = vmatpush1.msra.mxu0 0.0
        %339 = vmatprep.mubr.f32.mxu0 0.0
        %340 = vmatmul.mubr.f32.gmra.mrb[0].mxu0 %v251
        %v341 = vpop.f32.mrb[0].mxu0
        %v342 = vadd.f32 %v273, %v341
        %v343 = vpop.f32.mrb[0].mxu0
        %344 = vdwg.mxu0
        %345 = vst [vmem:[%s246] sm:$0xff] %v342
        %s346 = sand.u32 %s132, 1
        %s347 = scalar_lea.sflag [#allocation4], %s346
        %s348 = sand.u32 %s132, 1
        %s349 = smul.addr %s348, 8
        %s350 = scalar_lea.vmem [#allocation7], %s349
        // Predicated region
        $region41: #{tpu_custom_call.1} parent=31 // pred_check
          %p351 = pneg %p142
        $region42: #{tpu_custom_call.1} parent=31 // pred_check_branch
          %353 = sbr.rel (%p351) target = $region44
        $region43: #{tpu_custom_call.1} parent=31 // pred_region
          %s355 = ssub.s32 128, 128
          %356 = vsyncadd %s347, %s355
          %s357 = sadd.s32 %s27, %s26
          %s358 = smul.addr %s357, 128
          %s359 = scalar_lea.hbm %s3, %s358
          %s361 = sshll.u32 %s350, 4
          %s362 = int_to_ptr.vmem [resolvable:$true] %s361
          %364 = dma.vmem_to_hbm [thread:$0]  %s362, 128, %s359, %s347
        $region44: #{tpu_custom_call.1} parent=31 // pred_fallthru
          _
      $region32: #{tpu_custom_call.1} parent=5 // pred_fallthru
        _
      %p365 = scmp.le.s32.totalorder 2, %s16
      // Predicated region
      $region45: #{tpu_custom_call.1} parent=5 // pred_check
        %p366 = pneg %p365
      $region46: #{tpu_custom_call.1} parent=5 // pred_check_branch
        %368 = sbr.rel (%p366) target = $region48
      $region47: #{tpu_custom_call.1} parent=5 // pred_region
        %s369 = ssub.s32 %s16, 2
        // Predicated region
        $region49: #{tpu_custom_call.1} parent=47 // pred_check
          %p370 = pneg %p148
        $region50: #{tpu_custom_call.1} parent=47 // pred_check_branch
          %372 = sbr.rel (%p370) target = $region52
        $region51: #{tpu_custom_call.1} parent=47 // pred_region
          %s373 = sand.u32 %s133, 1
          %s374 = scalar_lea.sflag [#allocation4], %s373
          %s375 = sand.u32 %s133, 1
          %s376 = smul.addr %s375, 8
          %s377 = scalar_lea.vmem [#allocation7], %s376
          %378 = dma.done %s374, 128
        $region52: #{tpu_custom_call.1} parent=47 // pred_fallthru
          _
      $region48: #{tpu_custom_call.1} parent=5 // pred_fallthru
        _
    $region6: #{tpu_custom_call.1} parent=1 // loop_footer
      %s20 = sadd.s32 1, %s16
    $region7: #{tpu_custom_call.1} parent=1 // loop_footer_branch
      %15 = sbr.rel target = $region3
    $region8: #{tpu_custom_call.1} parent=1 // loop_exit
      _
    %379 = vsyncpa [#allocation3], 1
    %s380 = scalar_lea.sflag [#allocation3], 1
    %381 = vsyncpa %s380, 1
    %382 = vsyncpa [#allocation6], 1
    %383 = vsyncpa [#allocation4], 1
    %s384 = scalar_lea.sflag [#allocation4], 1
    %385 = vsyncpa %s384, 1

</llo_original>
